<compile_context>
chip_gen: v6e
topology: v6e:2x2x1
jax: 0.10.0
libtpu: 0.0.40
codegen_flags: <defaults>
</compile_context>

<pallas_src>
import functools

import jax
import jax.numpy as jnp
from jax.experimental import pallas as pl
from jax.experimental.pallas import tpu as pltpu


def _bn_linear_kernel(x_ref, w_ref, b_ref, o_ref, *, eps, batch, tn, n_tiles,
                      mxu_dtype):
    """One output-channel tile of ((x - mean) * rsqrt(var + eps)) @ W.T + b.

    x_ref: (B, C_in)   -- resident across the grid (constant index_map)
    w_ref: (tn, C_in)  -- streamed weight tile, torch [out, in] layout, mxu_dtype
    b_ref: (1, C_out)  -- fully-resident bias (f32)
    o_ref: (B, tn)     -- output tile
    """
    # Batch statistics recomputed per tile: with the scale folded into the
    # (B, C_in) activation this is only ~3*B*C_in VPU ops + one XLU sublane
    # reduce + one EUP rsqrt per step, hidden under the weight DMA.
    x = x_ref[...].astype(jnp.float32)                          # (B, C_in)
    mean = jnp.mean(x, axis=0, keepdims=True)                   # (1, C_in)
    centered = x - mean                                         # (B, C_in)
    # torch.var default: unbiased estimator (divide by N-1). Requires B >= 2.
    var = jnp.sum(centered * centered, axis=0, keepdims=True) * (
        1.0 / float(batch - 1))
    scale = jax.lax.rsqrt(var + jnp.float32(eps))               # (1, C_in)

    # Fold the per-input-channel rsqrt scale into the ACTIVATION (B, C_in),
    # not the (tn, C_in) weight tile: the raw weight tile feeds the MXU
    # directly with no per-tile VPU multiply or cast.
    xn = (centered * scale).astype(mxu_dtype)                   # (B, C_in)

    y = jax.lax.dot_general(                                    # x_norm @ W.T
        xn, w_ref[...],
        dimension_numbers=(((1,), (1,)), ((), ())),
        preferred_element_type=jnp.float32)                     # (B, tn) f32

    if n_tiles == 1:
        bias_tile = b_ref[...]                                  # (1, tn)
    else:
        start = pl.multiple_of(pl.program_id(0) * tn, tn)       # lane-aligned
        bias_tile = b_ref[:, pl.ds(start, tn)]                  # (1, tn)
    o_ref[...] = (y + bias_tile.astype(jnp.float32)).astype(o_ref.dtype)


def _pick_tn(c_out, c_in, w_itemsize):
    """Output-channel tile width.

    Single grid step if the whole weight is small; otherwise the largest
    multiple-of-256 divisor of C_out whose double-buffered tile fits a ~12 MiB
    budget (safe under a 48 MiB VMEM cap on v7x, generous on v5e/v6e).
    """
    budget = 12 << 20
    if c_out * c_in * w_itemsize <= budget // 2:
        return c_out
    best = None
    for d in range(256, c_out + 1, 256):
        if c_out % d == 0 and 2 * d * c_in * w_itemsize <= budget:
            best = d
    if best is not None:
        return best
    return 256 if c_out % 256 == 0 else c_out


def batchnorm_forward(x, weight, bias, eps=1e-5, *,
                      mxu_dtype=jnp.bfloat16, tn=None):
    """Forward of the DNC BatchNorm module.

    x:      (B, C_in) activations.
    weight: (C_out, C_in), torch nn.Linear [out, in] layout.
    bias:   (C_out,).
    mxu_dtype: dtype the weight is streamed in and both MXU operands use.
        bf16 is the MXU fast path on v5e, v6e and v7x alike; accumulation is
        always f32. Pass jnp.float32 only for bit-tight verification.
    tn:     output-channel tile width (must divide C_out); auto-picked so the
        streamed weight tile is 1-6 MiB per grid step.
    """
    B, C_in = x.shape
    C_out, C_in_w = weight.shape
    assert C_in == C_in_w, "weight must be (C_out, C_in)"
    assert bias.shape == (C_out,)
    if B < 2:
        raise ValueError("unbiased variance (torch.var) requires batch >= 2")

    w_itemsize = jnp.dtype(mxu_dtype).itemsize
    x_itemsize = jnp.dtype(x.dtype).itemsize

    if tn is None:
        tn = _pick_tn(C_out, C_in, w_itemsize)
    assert C_out % tn == 0, "tn must divide C_out"
    n_tiles = C_out // tn
    # Resident-bias dynamic slicing needs a lane-aligned tile when tiling.
    assert n_tiles == 1 or tn % 128 == 0, \
        "tn must be a multiple of 128 when C_out is tiled"

    # Stream the weight in mxu_dtype (half the HBM bytes for bf16): at small B
    # the kernel is weight-bandwidth bound, so this is the dominant lever.
    w_stream = weight.astype(mxu_dtype)
    b2d = bias.reshape(1, C_out).astype(jnp.float32)

    kernel = functools.partial(
        _bn_linear_kernel, eps=float(eps), batch=B, tn=tn, n_tiles=n_tiles,
        mxu_dtype=mxu_dtype)

    # VMEM: resident x + resident bias + double-buffered weight/output tiles.
    # Cap well below v7x's 64 MiB physical VMEM (v5e/v6e have 128 MiB).
    vmem_est = (B * C_in * x_itemsize + C_out * 4
                + 2 * tn * C_in * w_itemsize + 2 * B * tn * x_itemsize)
    vmem_limit = int(min(max(2 * vmem_est + (1 << 20), 16 << 20), 48 << 20))

    cost = pl.CostEstimate(
        flops=2 * B * C_in * C_out,
        transcendentals=n_tiles * C_in,
        bytes_accessed=(B * C_in * x_itemsize            # x read
                        + C_out * C_in * w_itemsize      # weight read (streamed dtype)
                        + C_out * 4                      # bias read
                        + B * C_out * x_itemsize),       # output write
    )

    return pl.pallas_call(
        kernel,
        out_shape=jax.ShapeDtypeStruct((B, C_out), x.dtype),
        grid_spec=pltpu.PrefetchScalarGridSpec(
            num_scalar_prefetch=0,
            grid=(n_tiles,),
            in_specs=[
                pl.BlockSpec((B, C_in), lambda j: (0, 0)),     # x: resident
                pl.BlockSpec((tn, C_in), lambda j: (j, 0)),    # weight: streamed
                pl.BlockSpec((1, C_out), lambda j: (0, 0)),    # bias: resident
            ],
            out_specs=pl.BlockSpec((B, tn), lambda j: (0, j)),
        ),
        compiler_params=pltpu.CompilerParams(
            # Sequential sweep over output-channel tiles. Plain "parallel"
            # does not change codegen; only CORE_PARALLEL would split tiles
            # across TensorCores, and this kernel is HBM-bound anyway.
            dimension_semantics=("arbitrary",),
            vmem_limit_bytes=vmem_limit,
        ),
        cost_estimate=cost,
    )(x, w_stream, b2d)


def _reference(x, weight, bias, eps=1e-5):
    mean = jnp.mean(x, axis=0, keepdims=True)
    var = jnp.var(x, axis=0, keepdims=True, ddof=1)   # unbiased, like torch.var
    new_x = (x - mean) * jax.lax.rsqrt(var + eps)
    return new_x @ weight.T + bias


def _make_inputs(key, B, C):
    kx, kw, kb = jax.random.split(key, 3)
    x = jax.random.normal(kx, (B, C), dtype=jnp.float32)
    # Deterministic nn.Linear(C, C)-style init: U(-1/sqrt(C), 1/sqrt(C))
    bound = 1.0 / (C ** 0.5)
    weight = jax.random.uniform(kw, (C, C), jnp.float32, -bound, bound)
    bias = jax.random.uniform(kb, (C,), jnp.float32, -bound, bound)
    return x, weight, bias


if __name__ == "__main__":
    key = jax.random.PRNGKey(0)
    k_small, k_large = jax.random.split(key, 2)

    # 1) Native module size (B=8, C=32): single tile, f32 operands, strict check.
    B, C = 8, 32
    x, weight, bias = _make_inputs(k_small, B, C)
    out = batchnorm_forward(x, weight, bias, eps=1e-5, mxu_dtype=jnp.float32)
    out = jax.block_until_ready(out)
    ref = _reference(x, weight, bias, eps=1e-5)
    assert out.shape == (B, C)
    assert jnp.allclose(out, ref, atol=1e-4, rtol=1e-5), "f32 mismatch vs reference"

    # 2) Scaled-up size (C=512), default config: bf16 weight stream, single
    #    grid step (tn auto-picks C_out since the whole bf16 weight is 512 KiB).
    B2, C2 = 8, 512
    x2, weight2, bias2 = _make_inputs(k_large, B2, C2)
    out2 = jax.block_until_ready(batchnorm_forward(x2, weight2, bias2, eps=1e-5))
    ref2 = _reference(x2, weight2, bias2, eps=1e-5)
    assert out2.shape == (B2, C2)
    assert jnp.allclose(out2, ref2, atol=5e-2, rtol=5e-2), "bf16 mismatch (1 tile)"

    # 3) Same size with tn forced to 256: exercises the multi-tile grid and the
    #    resident-bias dynamic lane slice.
    out3 = jax.block_until_ready(
        batchnorm_forward(x2, weight2, bias2, eps=1e-5,
                          mxu_dtype=jnp.bfloat16, tn=256))
    assert out3.shape == (B2, C2)
    assert jnp.allclose(out3, ref2, atol=5e-2, rtol=5e-2), "bf16 mismatch (2 tiles)"

    print("KERNEL_OK")
</pallas_src>

<mosaic_0001>
module attributes {stable_mosaic.version = 11 : i64} {
  func.func @_bn_linear_kernel(%arg0: i32, %arg1: memref<8x32xf32, #tpu.memory_space<vmem>>, %arg2: memref<32x32xf32, #tpu.memory_space<vmem>>, %arg3: memref<1x32xf32, #tpu.memory_space<vmem>>, %arg4: memref<8x32xf32, #tpu.memory_space<vmem>>) attributes {dimension_semantics = [#tpu.dimension_semantics<arbitrary>], iteration_bounds = array<i64: 1>, scalar_prefetch = 0 : i64, scratch_operands = 0 : i64, tpu.core_type = #tpu.core_type<tc>, window_params = [{pipeline_mode = #tpu.pipeline_mode<synchronous>, transform_indices = @transform_0, window_bounds = array<i64: 8, 32>}, {transform_indices = @transform_1, window_bounds = array<i64: 32, 32>}, {pipeline_mode = #tpu.pipeline_mode<synchronous>, transform_indices = @transform_2, window_bounds = array<i64: 1, 32>}, {transform_indices = @transform_3, window_bounds = array<i64: 8, 32>}]} {
    %c0 = arith.constant 0 : index
    %c0_0 = arith.constant 0 : index
    %0 = vector.load %arg1[%c0, %c0_0] : memref<8x32xf32, #tpu.memory_space<vmem>>, vector<8x32xf32>
    %cst = arith.constant dense<0.000000e+00> : vector<32xf32>
    %1 = vector.multi_reduction <add>, %0, %cst [0] : vector<8x32xf32> to vector<32xf32>
    %2 = vector.shape_cast %1 : vector<32xf32> to vector<1x32xf32>
    %cst_1 = arith.constant 8.000000e+00 : f32
    %3 = vector.broadcast %cst_1 : f32 to vector<1x32xf32>
    %4 = arith.divf %2, %3 : vector<1x32xf32>
    %5 = vector.broadcast %4 : vector<1x32xf32> to vector<8x32xf32>
    %6 = arith.subf %0, %5 : vector<8x32xf32>
    %7 = arith.mulf %6, %6 : vector<8x32xf32>
    %cst_2 = arith.constant dense<0.000000e+00> : vector<32xf32>
    %8 = vector.multi_reduction <add>, %7, %cst_2 [0] : vector<8x32xf32> to vector<32xf32>
    %9 = vector.shape_cast %8 : vector<32xf32> to vector<1x32xf32>
    %cst_3 = arith.constant 0.142857149 : f32
    %10 = vector.broadcast %cst_3 : f32 to vector<1x32xf32>
    %11 = arith.mulf %9, %10 : vector<1x32xf32>
    %cst_4 = arith.constant 9.99999974E-6 : f32
    %12 = vector.broadcast %cst_4 : f32 to vector<1x32xf32>
    %13 = arith.addf %11, %12 : vector<1x32xf32>
    %14 = math.rsqrt %13 : vector<1x32xf32>
    %15 = vector.broadcast %14 : vector<1x32xf32> to vector<8x32xf32>
    %16 = arith.mulf %6, %15 : vector<8x32xf32>
    %c0_5 = arith.constant 0 : index
    %c0_6 = arith.constant 0 : index
    %17 = vector.load %arg2[%c0_5, %c0_6] : memref<32x32xf32, #tpu.memory_space<vmem>>, vector<32x32xf32>
    %cst_7 = arith.constant dense<0.000000e+00> : vector<8x32xf32>
    %18 = tpu.matmul %16, %17, %cst_7 {dimension_numbers = #tpu.dot_dimension_numbers<[1], [1], [0], [0], [0, 0, 1, 0], [], []>} : vector<8x32xf32>, vector<32x32xf32>, vector<8x32xf32> -> vector<8x32xf32>
    %c0_8 = arith.constant 0 : index
    %c0_9 = arith.constant 0 : index
    %19 = vector.load %arg3[%c0_8, %c0_9] : memref<1x32xf32, #tpu.memory_space<vmem>>, vector<1x32xf32>
    %20 = vector.broadcast %19 : vector<1x32xf32> to vector<8x32xf32>
    %21 = arith.addf %18, %20 : vector<8x32xf32>
    %c0_10 = arith.constant 0 : index
    %c0_11 = arith.constant 0 : index
    %22 = vector.load %arg4[%c0_10, %c0_11] : memref<8x32xf32, #tpu.memory_space<vmem>>, vector<8x32xf32>
    tpu.vector_store %arg4[%c0_10, %c0_11], %21 {strides = array<i32>} : memref<8x32xf32, #tpu.memory_space<vmem>>, vector<8x32xf32>,
    return
  }
  func.func @transform_0(%arg0: i32) -> (i32, i32) {
    %c0_i32 = arith.constant 0 : i32
    %c0_i32_0 = arith.constant 0 : i32
    %c0_i32_1 = arith.constant 0 : i32
    return %c0_i32, %c0_i32_0 : i32, i32
  }
  func.func @transform_1(%arg0: i32) -> (i32, i32) {
    %c0_i32 = arith.constant 0 : i32
    %c0_i32_0 = arith.constant 0 : i32
    return %arg0, %c0_i32 : i32, i32
  }
  func.func @transform_2(%arg0: i32) -> (i32, i32) {
    %c0_i32 = arith.constant 0 : i32
    %c0_i32_0 = arith.constant 0 : i32
    %c0_i32_1 = arith.constant 0 : i32
    return %c0_i32, %c0_i32_0 : i32, i32
  }
  func.func @transform_3(%arg0: i32) -> (i32, i32) {
    %c0_i32 = arith.constant 0 : i32
    %c0_i32_0 = arith.constant 0 : i32
    return %c0_i32, %arg0 : i32, i32
  }
}

</mosaic_0001>

<llo_original>
// kernel: tpu_custom_call.1
$region0: #{tpu_custom_call.1}
  #allocation0 [shape = 'u32[]', space=smem, size = 0x4, offset = 0x4, fixed_abs, tag = 'smem constant byte address 0x4 - core index']
  #allocation1 [shape = 'u32[144,128]{1,0:T(1,128)}', space=vmem, size = 0x12000, scoped, tag = 'internal scratch']
  %s0 = inlined_call_operand.hbm [shape: f32[8,32], index: 0, kind: input, shape index: {}]
  %s1 = inlined_call_operand.hbm [shape: f32[32,32], index: 1, kind: input, shape index: {}]
  %s2 = inlined_call_operand.vmem [shape: f32[1,32], index: 2, kind: input, shape index: {}]
  %s3 = inlined_call_operand.hbm [shape: f32[8,32], index: 3, kind: output, shape index: {}]
  %s4 = sld [smem:[#allocation0]]
  $region30: #{tpu_custom_call.1} parent=0
    _
  %s6 = ssub.s32 1, %s4
  %s7 = scalar_select 0, %s6, %s4
  $region1: #{tpu_custom_call.1} parent=0
    #allocation2 [shape = 'u8[4096]{0}', space=vmem, size = 0x1000, scoped, tag = 'input window, operand 0, single buffered']
    #allocation3 [shape = 's32[1]{0}', space=sflag, size = 0x4, scoped, tag = 'scoped memory for tpu_custom_call.1']
    #allocation4 [shape = 's32[1]{0}', space=sflag, size = 0x4, scoped, tag = 'scoped memory for tpu_custom_call.1']
    #allocation5 [shape = 'u8[16384]{0}', space=vmem, size = 0x4000, scoped, tag = 'input window, operand 1, single buffered']
    #allocation6 [shape = 's32[1]{0}', space=sflag, size = 0x4, scoped, tag = 'scoped memory for tpu_custom_call.1']
    #allocation7 [shape = 'u8[4096]{0}', space=vmem, size = 0x1000, scoped, tag = 'output window, operand 0, single buffered']
    %8 = vsyncpa [#allocation3], 0
    %9 = vsyncpa [#allocation6], 0
    %10 = vsyncpa [#allocation4], 0
    // Predicated region
    $region2: #{tpu_custom_call.1} parent=1 // pred_check
      _
    $region3: #{tpu_custom_call.1} parent=1 // pred_check_branch
      %12 = sbr.rel (0) target = $region5
    $region4: #{tpu_custom_call.1} parent=1 // pred_region
      %s14 = ssub.s32 128, 128
      %15 = vsyncadd [#allocation3], %s14
      %s17 = sshll.u32 [#allocation2], 4
      %s18 = int_to_ptr.vmem [resolvable:$true] %s17
      %20 = dma.hbm_to_vmem [thread:$0]  %s0, 128, %s18, [#allocation3]
    $region5: #{tpu_custom_call.1} parent=1 // pred_fallthru
      _
    // Predicated region
    $region6: #{tpu_custom_call.1} parent=1 // pred_check
      _
    $region7: #{tpu_custom_call.1} parent=1 // pred_check_branch
      %22 = sbr.rel (0) target = $region9
    $region8: #{tpu_custom_call.1} parent=1 // pred_region
      %s24 = ssub.s32 512, 512
      %25 = vsyncadd [#allocation6], %s24
      %s26 = sshll.u32 [#allocation5], 4
      %s27 = int_to_ptr.vmem [resolvable:$true] %s26
      %32 = dma.hbm_to_vmem [thread:$0]  %s1, 512, %s27, [#allocation6], 128, 128, 8
    $region9: #{tpu_custom_call.1} parent=1 // pred_fallthru
      _
    // Predicated region
    $region10: #{tpu_custom_call.1} parent=1 // pred_check
      _
    $region11: #{tpu_custom_call.1} parent=1 // pred_check_branch
      %34 = sbr.rel (0) target = $region13
    $region12: #{tpu_custom_call.1} parent=1 // pred_region
      _
    $region13: #{tpu_custom_call.1} parent=1 // pred_fallthru
      _
    // Predicated region
    $region14: #{tpu_custom_call.1} parent=1 // pred_check
      _
    $region15: #{tpu_custom_call.1} parent=1 // pred_check_branch
      %36 = sbr.rel (0) target = $region17
    $region16: #{tpu_custom_call.1} parent=1 // pred_region
      %37 = dma.done [#allocation3], 128
    $region17: #{tpu_custom_call.1} parent=1 // pred_fallthru
      _
    // Predicated region
    $region18: #{tpu_custom_call.1} parent=1 // pred_check
      _
    $region19: #{tpu_custom_call.1} parent=1 // pred_check_branch
      %39 = sbr.rel (0) target = $region21
    $region20: #{tpu_custom_call.1} parent=1 // pred_region
      %40 = dma.done [#allocation6], 512
    $region21: #{tpu_custom_call.1} parent=1 // pred_fallthru
      _
    %v41 = vld [vmem:[#allocation2] sm:$0xff]
    %vm42 = vcmask 261120
    %v43 = vsel %vm42, %v41, 0.0
    %v44 = vrot.slane %v43, 4
    %v45 = vadd.f32 %v43, %v44
    %v46 = vrot.slane %v45, 2
    %v47 = vadd.f32 %v45, %v46
    %v48 = vrot.slane %v47, 1
    %v49 = vadd.f32 %v47, %v48
    %v50 = vrcp.pop 8.0
    %v51 = vmul.f32 %v49, %v50
    %v52 = vsub.f32 %v41, %v51
    %v53 = vmul.f32 %v52, %v52
    %v54 = vsel %vm42, %v53, 0.0
    %v55 = vrot.slane %v54, 4
    %v56 = vadd.f32 %v54, %v55
    %v57 = vrot.slane %v56, 2
    %v58 = vadd.f32 %v56, %v57
    %v59 = vrot.slane %v58, 1
    %v60 = vadd.f32 %v58, %v59
    %v61 = vmul.f32 %v60, 0.14285715
    %v62 = vadd.f32 %v61, 1e-05
    %v63 = vrsqrt.pop %v62
    %v64 = vmul.f32 %v52, %v63
    %v65 = vld [vmem:[#allocation5] sm:$0xff]
    %v66 = vld [vmem:[#allocation5 + $0x8] sm:$0xff]
    %v67 = vld [vmem:[#allocation5 + $0x10] sm:$0xff]
    %v68 = vld [vmem:[#allocation5 + $0x18] sm:$0xff]
    %v69 = vld [vmem:[%s2] sm:$0x1]
    %v71 = vlaneseq
    %v72 = vshrl.u32 %v71, 7
    %v73 = vsub.s32 0, %v72
    %v74 = vrot.slane %v69, %v73
    %v77 = vsel %vm42, %v64, 0
    %v80 = vsel %vm42, %v65, 0
    %v83 = vsel %vm42, %v66, 0
    %v86 = vsel %vm42, %v67, 0
    %v89 = vsel %vm42, %v68, 0
    %91 = vmatprep.subr.mxu0 0.0
    %92 = vmatpush1.xpose.msra.mxu0 0.0
    %93 = vmatprep.subr.mxu0 0.0
    %94 = vmatpush1.xpose.msra.mxu0 0.0
    %95 = vmatprep.subr.mxu0 0.0
    %96 = vmatpush1.xpose.msra.mxu0 0.0
    %97 = vmatprep.subr.mxu0 0.0
    %98 = vmatpush1.xpose.msra.mxu0 0.0
    %99 = vmatprep.subr.mxu0 0.0
    %100 = vmatpush1.xpose.msra.mxu0 0.0
    %101 = vmatprep.subr.mxu0 0.0
    %102 = vmatpush1.xpose.msra.mxu0 0.0
    %103 = vmatprep.subr.mxu0 0.0
    %104 = vmatpush1.xpose.msra.mxu0 0.0
    %105 = vmatprep.subr.mxu0 0.0
    %106 = vmatpush1.xpose.msra.mxu0 0.0
    %107 = vmatprep.subr.mxu0 0.0
    %108 = vmatpush1.xpose.msra.mxu0 0.0
    %109 = vmatprep.subr.mxu0 0.0
    %110 = vmatpush1.xpose.msra.mxu0 0.0
    %111 = vmatprep.subr.mxu0 0.0
    %112 = vmatpush1.xpose.msra.mxu0 0.0
    %113 = vmatprep.subr.mxu0 0.0
    %114 = vmatpush1.xpose.msra.mxu0 0.0
    %115 = vmatprep.subr.mxu0 0.0
    %116 = vmatpush1.xpose.msra.mxu0 %v89
    %117 = vmatprep.subr.mxu0 0.0
    %118 = vmatpush1.xpose.msra.mxu0 %v86
    %119 = vmatprep.subr.mxu0 0.0
    %120 = vmatpush1.xpose.msra.mxu0 %v83
    %121 = vmatprep.subr.mxu0 0.0
    %122 = vmatpush1.xpose.msra.mxu0 %v80
    %123 = vmatprep.subr.mxu0 0.0
    %124 = vmatpush2.xpose.msra.mxu0 0.0
    %125 = vmatprep.subr.mxu0 0.0
    %126 = vmatpush2.xpose.msra.mxu0 0.0
    %127 = vmatprep.subr.mxu0 0.0
    %128 = vmatpush2.xpose.msra.mxu0 0.0
    %129 = vmatprep.subr.mxu0 0.0
    %130 = vmatpush2.xpose.msra.mxu0 0.0
    %131 = vmatprep.subr.mxu0 0.0
    %132 = vmatpush2.xpose.msra.mxu0 0.0
    %133 = vmatprep.subr.mxu0 0.0
    %134 = vmatpush2.xpose.msra.mxu0 0.0
    %135 = vmatprep.subr.mxu0 0.0
    %136 = vmatpush2.xpose.msra.mxu0 0.0
    %137 = vmatprep.subr.mxu0 0.0
    %138 = vmatpush2.xpose.msra.mxu0 0.0
    %139 = vmatprep.subr.mxu0 0.0
    %140 = vmatpush2.xpose.msra.mxu0 0.0
    %141 = vmatprep.subr.mxu0 0.0
    %142 = vmatpush2.xpose.msra.mxu0 0.0
    %143 = vmatprep.subr.mxu0 0.0
    %144 = vmatpush2.xpose.msra.mxu0 0.0
    %145 = vmatprep.subr.mxu0 0.0
    %146 = vmatpush2.xpose.msra.mxu0 0.0
    %147 = vmatprep.subr.mxu0 0.0
    %148 = vmatpush2.xpose.msra.mxu0 0.0
    %149 = vmatprep.subr.mxu0 0.0
    %150 = vmatpush2.xpose.msra.mxu0 0.0
    %151 = vmatprep.subr.mxu0 0.0
    %152 = vmatpush2.xpose.msra.mxu0 0.0
    %153 = vmatprep.subr.mxu0 0.0
    %154 = vmatpush2.xpose.msra.mxu0 0.0
    %155 = vmatprep.mubr.f32.mxu0 0.0
    %156 = vmatmul.mubr.f32.gmra.mxu0 %v77
    %v157 = vpop.f32.mrf.mxu0
    %v158 = vadd.f32 %v74, %v157
    %v159 = vpop.f32.mrf.mxu0
    %160 = vdwg.mxu0
    %161 = vst.msk [vmem:[#allocation7] sm:$0xff] %vm42, %v158
    // Predicated region
    $region22: #{tpu_custom_call.1} parent=1 // pred_check
      _
    $region23: #{tpu_custom_call.1} parent=1 // pred_check_branch
      %163 = sbr.rel (0) target = $region25
    $region24: #{tpu_custom_call.1} parent=1 // pred_region
      %s165 = ssub.s32 128, 128
      %166 = vsyncadd [#allocation4], %s165
      %s168 = sshll.u32 [#allocation7], 4
      %s169 = int_to_ptr.vmem [resolvable:$true] %s168
      %171 = dma.vmem_to_hbm [thread:$0]  %s169, 128, %s3, [#allocation4]
    $region25: #{tpu_custom_call.1} parent=1 // pred_fallthru
      _
    // Predicated region
    $region26: #{tpu_custom_call.1} parent=1 // pred_check
      _
    $region27: #{tpu_custom_call.1} parent=1 // pred_check_branch
      %173 = sbr.rel (0) target = $region29
    $region28: #{tpu_custom_call.1} parent=1 // pred_region
      %174 = dma.done [#allocation4], 128
    $region29: #{tpu_custom_call.1} parent=1 // pred_fallthru
      _
    %175 = vsyncpa [#allocation3], 1
    %176 = vsyncpa [#allocation6], 1
    %177 = vsyncpa [#allocation4], 1

</llo_original>
